<compile_context>
chip_gen: v6e
topology: v6e:2x2x1
jax: 0.10.0
libtpu: 0.0.40
codegen_flags: <defaults>
</compile_context>

<pallas_src>
import functools

import jax
import jax.numpy as jnp
from jax import lax
from jax.experimental import pallas as pl
from jax.experimental.pallas import tpu as pltpu

EPS = 1e-5
_LANE = 128
_SUBLANE = 8


# --------------------------------------------------------------------------- #
# Sizing helpers (generation aware)
# --------------------------------------------------------------------------- #
def _vmem_capacity_bytes():
    try:
        cap = getattr(pltpu.get_tpu_info(), "vmem_capacity_bytes", None)
        if cap:
            return int(cap)
    except Exception:
        pass
    return 64 << 20  # conservative fallback (v7x-sized VMEM)


def _vmem_limit(need_bytes, cap):
    limit = max(32 << 20, int(need_bytes) + (8 << 20))
    return int(min(limit, cap - (4 << 20)))


def _pick_tile8(total, max_val):
    """Largest divisor of `total` that is a multiple of 8 and <= max_val
    (never below the minimum legal tile); `total` itself if not 8-divisible."""
    if total % _SUBLANE != 0:
        return total
    t = max(_SUBLANE, (min(max_val, total) // _SUBLANE) * _SUBLANE)
    while total % t != 0:
        t -= _SUBLANE
    return t


def _pick_divisor(total, max_val):
    t = max(1, min(max_val, total))
    while total % t != 0:
        t -= 1
    return t


def _pick_lane_fold(L):
    """Largest multiple-of-128 divisor of L that still gives >= 8 sub-rows
    (sublane-dense vregs); falls back to 128 (tiny L) or L (L % 128 != 0)."""
    if L % _LANE != 0:
        return L
    best = _LANE
    for k in range(1, L // _LANE + 1):
        lc = _LANE * k
        if L % lc == 0 and L // lc >= _SUBLANE:
            best = lc
    return best


def _maybe_buffered_spec(block, index_map, depth):
    if depth <= 2:
        return pl.BlockSpec(block, index_map)
    try:
        return pl.BlockSpec(block, index_map, pipeline_mode=pl.Buffered(depth))
    except TypeError:  # older BlockSpec signature without pipeline_mode
        return pl.BlockSpec(block, index_map)


# --------------------------------------------------------------------------- #
# Kernels
# --------------------------------------------------------------------------- #
def _fused_kernel(x_ref, o_ref, *, count, reduce_axes):
    """Row-resident single pass: centered mean/var + normalize (1 read, 1 write)."""
    inv_n = 1.0 / count
    x = x_ref[...].astype(jnp.float32)
    s = x
    for ax in sorted(reduce_axes):          # batch/sublane first, lane (XLU) last
        s = jnp.sum(s, axis=ax, keepdims=True)
    mean = s * inv_n
    d = x - mean
    q = d * d
    for ax in sorted(reduce_axes):
        q = jnp.sum(q, axis=ax, keepdims=True)
    var = jnp.maximum(q * inv_n, 0.0)       # biased, clamped
    rstd = lax.rsqrt(var + EPS)
    o_ref[...] = (d * rstd).astype(o_ref.dtype)


def _stats_kernel(x_ref, scale_ref, shift_ref, *, count, reduce_axes):
    """Pass 1: accumulate sum / sumsq into the resident output blocks,
    finalize to scale = rstd, shift = -mean * rstd."""
    r = pl.program_id(1)

    @pl.when(r == 0)
    def _init():
        scale_ref[...] = jnp.zeros_like(scale_ref)
        shift_ref[...] = jnp.zeros_like(shift_ref)

    x = x_ref[...].astype(jnp.float32)      # single load feeds both accumulators
    s = x
    q = x * x
    for ax in sorted(reduce_axes):          # batch/sublane first, lane (XLU) once
        s = jnp.sum(s, axis=ax, keepdims=True)
        q = jnp.sum(q, axis=ax, keepdims=True)
    scale_ref[...] += s                     # running sum
    shift_ref[...] += q                     # running sum of squares

    @pl.when(r == pl.num_programs(1) - 1)
    def _finalize():
        inv_n = 1.0 / count
        mean = scale_ref[...] * inv_n
        var = jnp.maximum(shift_ref[...] * inv_n - mean * mean, 0.0)
        rstd = lax.rsqrt(var + EPS)
        scale_ref[...] = rstd
        shift_ref[...] = -mean * rstd


def _apply_kernel(x_ref, scale_ref, shift_ref, o_ref):
    """Pass 2: y = x * scale + shift (single FMA per element)."""
    x = x_ref[...].astype(jnp.float32)
    o_ref[...] = (x * scale_ref[...] + shift_ref[...]).astype(o_ref.dtype)


# --------------------------------------------------------------------------- #
# pallas_call wrappers
# --------------------------------------------------------------------------- #
def _fused(x3, *, grid, block, index_map, reduce_axes, count, vmem_limit):
    spec = pl.BlockSpec(block, index_map)
    kernel = functools.partial(_fused_kernel, count=float(count),
                               reduce_axes=reduce_axes)
    return pl.pallas_call(
        kernel,
        out_shape=jax.ShapeDtypeStruct(x3.shape, x3.dtype),
        grid_spec=pltpu.PrefetchScalarGridSpec(
            num_scalar_prefetch=0, grid=grid,
            in_specs=[spec], out_specs=spec),
        compiler_params=pltpu.CompilerParams(
            dimension_semantics=("parallel",) * len(grid),
            vmem_limit_bytes=vmem_limit),
    )(x3)


def _two_pass(x3, *, grid, x_block, x_index, stat_shape, stat_block, stat_index,
              reduce_axes, count, vmem_limit):
    depth = 3 if grid[-1] >= 3 else 2
    x_spec_p1 = _maybe_buffered_spec(x_block, x_index, depth)
    x_spec_p2 = pl.BlockSpec(x_block, x_index)
    stat_spec = pl.BlockSpec(stat_block, stat_index)

    stats = functools.partial(_stats_kernel, count=float(count),
                              reduce_axes=reduce_axes)
    scale, shift = pl.pallas_call(
        stats,
        out_shape=(jax.ShapeDtypeStruct(stat_shape, jnp.float32),
                   jax.ShapeDtypeStruct(stat_shape, jnp.float32)),
        grid_spec=pltpu.PrefetchScalarGridSpec(
            num_scalar_prefetch=0, grid=grid,
            in_specs=[x_spec_p1], out_specs=[stat_spec, stat_spec]),
        compiler_params=pltpu.CompilerParams(
            dimension_semantics=("parallel", "arbitrary"),
            vmem_limit_bytes=vmem_limit),
    )(x3)

    y3 = pl.pallas_call(
        _apply_kernel,
        out_shape=jax.ShapeDtypeStruct(x3.shape, x3.dtype),
        grid_spec=pltpu.PrefetchScalarGridSpec(
            num_scalar_prefetch=0, grid=grid,
            in_specs=[x_spec_p2, stat_spec, stat_spec],
            out_specs=x_spec_p2),
        compiler_params=pltpu.CompilerParams(
            dimension_semantics=("parallel", "parallel"),
            vmem_limit_bytes=vmem_limit),
    )(x3, scale, shift)
    return y3


# --------------------------------------------------------------------------- #
# Public entry point
# --------------------------------------------------------------------------- #
def dynamic_normalization(x, batch_norm=True, *, max_block_elems=None):
    """x: (N, C, H, W). Fresh norm layer per call (training mode, weight=1, bias=0)."""
    N, C, H, W = x.shape
    HW = H * W
    itemsize = jnp.dtype(x.dtype).itemsize

    cap = _vmem_capacity_bytes()
    vmem_target = min(int(cap * 0.80), cap - (8 << 20))
    # Per-element working-set bytes: double-buffered in + out (native dtype)
    # plus ~two f32 temporaries inside the kernel.
    w = 4 * itemsize + 8
    if max_block_elems is None:
        elem_budget = max(1, (vmem_target - (8 << 20)) // w)
    else:
        elem_budget = int(max_block_elems)

    if batch_norm:
        # BatchNorm2d: per-channel stats over (N, H, W) on the free (N, C, HW)
        # view.  Blocks always keep the full HW (no lane masking needed).
        x3 = x.reshape(N, C, HW)
        count = N * HW
        tc = _pick_tile8(C, max(1, elem_budget // max(1, N * HW)))
        row_elems = N * tc * HW
        if row_elems <= elem_budget:
            # Fused single pass over whole channel-group rows.
            y3 = _fused(
                x3, grid=(C // tc,), block=(N, tc, HW),
                index_map=lambda c: (0, c, 0),
                reduce_axes=(0, 2), count=count,
                vmem_limit=_vmem_limit(row_elems * w, cap))
        else:
            # Two-pass: channels parallel, reduction split over N (keeps HW whole).
            tc = _pick_tile8(C, max(1, elem_budget // HW))
            tn = _pick_divisor(N, max(1, elem_budget // (tc * HW)))
            block_elems = tn * tc * HW
            y3 = _two_pass(
                x3, grid=(C // tc, N // tn),
                x_block=(tn, tc, HW), x_index=lambda c, n: (n, c, 0),
                stat_shape=(1, C, 1), stat_block=(1, tc, 1),
                stat_index=lambda c, n: (0, c, 0),
                reduce_axes=(0, 2), count=count,
                vmem_limit=_vmem_limit(block_elems * w, cap))
    else:
        # LayerNorm([C, H, W]): per-sample stats.  Fold each sample into a
        # sublane-dense (S, lc) slab (lc multiple of 128 when possible).
        L = C * HW
        count = L
        lc = _pick_lane_fold(L)
        S = L // lc
        x3 = x.reshape(N, S, lc)
        if L <= elem_budget:
            y3 = _fused(
                x3, grid=(N,), block=(1, S, lc),
                index_map=lambda n: (n, 0, 0),
                reduce_axes=(1, 2), count=count,
                vmem_limit=_vmem_limit(L * w, cap))
        else:
            ts = _pick_tile8(S, max(1, elem_budget // lc))
            block_elems = ts * lc
            y3 = _two_pass(
                x3, grid=(N, S // ts),
                x_block=(1, ts, lc), x_index=lambda n, s: (n, s, 0),
                stat_shape=(N, 1, 1), stat_block=(1, 1, 1),
                stat_index=lambda n, s: (n, 0, 0),
                reduce_axes=(1, 2), count=count,
                vmem_limit=_vmem_limit(block_elems * w, cap))

    return y3.reshape(N, C, H, W)


# --------------------------------------------------------------------------- #
# Self-test
# --------------------------------------------------------------------------- #
if __name__ == "__main__":
    key = jax.random.PRNGKey(0)
    k1, k2 = jax.random.split(key)

    def bn_ref(x):
        m = jnp.mean(x, axis=(0, 2, 3), keepdims=True)
        v = jnp.mean((x - m) ** 2, axis=(0, 2, 3), keepdims=True)
        return (x - m) / jnp.sqrt(v + EPS)

    def ln_ref(x):
        m = jnp.mean(x, axis=(1, 2, 3), keepdims=True)
        v = jnp.mean((x - m) ** 2, axis=(1, 2, 3), keepdims=True)
        return (x - m) / jnp.sqrt(v + EPS)

    x1 = jax.random.normal(k1, (2, 4, 16, 16), dtype=jnp.float32) * 3.0 + 1.5
    x2 = jax.random.normal(k2, (2, 8, 16, 16), dtype=jnp.float32) * 2.0 - 0.7

    # Fused (row-resident) paths -- the common case.
    y = jax.block_until_ready(dynamic_normalization(x1, batch_norm=True))
    assert jnp.allclose(y, bn_ref(x1), atol=1e-4, rtol=1e-4), "fused batch-norm mismatch"
    y = jax.block_until_ready(dynamic_normalization(x1, batch_norm=False))
    assert jnp.allclose(y, ln_ref(x1), atol=1e-4, rtol=1e-4), "fused layer-norm mismatch"

    # Two-pass fallback paths, forced via a tiny block budget.
    y = jax.block_until_ready(
        dynamic_normalization(x2, batch_norm=True, max_block_elems=1024))
    assert jnp.allclose(y, bn_ref(x2), atol=1e-4, rtol=1e-4), "two-pass batch-norm mismatch"
    y = jax.block_until_ready(
        dynamic_normalization(x2, batch_norm=False, max_block_elems=1024))
    assert jnp.allclose(y, ln_ref(x2), atol=1e-4, rtol=1e-4), "two-pass layer-norm mismatch"

    print("KERNEL_OK")
</pallas_src>

<mosaic_0001>
module attributes {stable_mosaic.version = 11 : i64} {
  func.func @_fused_kernel(%arg0: i32, %arg1: memref<2x4x256xf32, #tpu.memory_space<vmem>>, %arg2: memref<2x4x256xf32, #tpu.memory_space<vmem>>) attributes {dimension_semantics = [#tpu.dimension_semantics<parallel>], iteration_bounds = array<i64: 1>, scalar_prefetch = 0 : i64, scratch_operands = 0 : i64, tpu.core_type = #tpu.core_type<tc>, window_params = [{transform_indices = @transform_0, window_bounds = array<i64: 2, 4, 256>}, {transform_indices = @transform_1, window_bounds = array<i64: 2, 4, 256>}]} {
    %c0 = arith.constant 0 : index
    %c0_0 = arith.constant 0 : index
    %c0_1 = arith.constant 0 : index
    %0 = vector.load %arg1[%c0, %c0_0, %c0_1] : memref<2x4x256xf32, #tpu.memory_space<vmem>>, vector<2x4x256xf32>
    %cst = arith.constant dense<0.000000e+00> : vector<4x256xf32>
    %1 = vector.multi_reduction <add>, %0, %cst [0] : vector<2x4x256xf32> to vector<4x256xf32>
    %2 = vector.shape_cast %1 : vector<4x256xf32> to vector<1x4x256xf32>
    %cst_2 = arith.constant dense<0.000000e+00> : vector<1x4xf32>
    %3 = vector.multi_reduction <add>, %2, %cst_2 [2] : vector<1x4x256xf32> to vector<1x4xf32>
    %4 = vector.shape_cast %3 : vector<1x4xf32> to vector<1x4x1xf32>
    %cst_3 = arith.constant 0.001953125 : f32
    %5 = vector.broadcast %cst_3 : f32 to vector<1x4x1xf32>
    %6 = arith.mulf %4, %5 : vector<1x4x1xf32>
    %7 = vector.broadcast %6 : vector<1x4x1xf32> to vector<2x4x256xf32>
    %8 = arith.subf %0, %7 : vector<2x4x256xf32>
    %9 = arith.mulf %8, %8 : vector<2x4x256xf32>
    %cst_4 = arith.constant dense<0.000000e+00> : vector<4x256xf32>
    %10 = vector.multi_reduction <add>, %9, %cst_4 [0] : vector<2x4x256xf32> to vector<4x256xf32>
    %11 = vector.shape_cast %10 : vector<4x256xf32> to vector<1x4x256xf32>
    %cst_5 = arith.constant dense<0.000000e+00> : vector<1x4xf32>
    %12 = vector.multi_reduction <add>, %11, %cst_5 [2] : vector<1x4x256xf32> to vector<1x4xf32>
    %13 = vector.shape_cast %12 : vector<1x4xf32> to vector<1x4x1xf32>
    %cst_6 = arith.constant 0.001953125 : f32
    %14 = vector.broadcast %cst_6 : f32 to vector<1x4x1xf32>
    %15 = arith.mulf %13, %14 : vector<1x4x1xf32>
    %cst_7 = arith.constant 0.000000e+00 : f32
    %16 = vector.broadcast %cst_7 : f32 to vector<1x4x1xf32>
    %17 = arith.maximumf %15, %16 : vector<1x4x1xf32>
    %cst_8 = arith.constant 9.99999974E-6 : f32
    %18 = vector.broadcast %cst_8 : f32 to vector<1x4x1xf32>
    %19 = arith.addf %17, %18 : vector<1x4x1xf32>
    %20 = math.rsqrt %19 : vector<1x4x1xf32>
    %21 = vector.broadcast %20 : vector<1x4x1xf32> to vector<2x4x256xf32>
    %22 = arith.mulf %8, %21 : vector<2x4x256xf32>
    %c0_9 = arith.constant 0 : index
    %c0_10 = arith.constant 0 : index
    %c0_11 = arith.constant 0 : index
    %23 = vector.load %arg2[%c0_9, %c0_10, %c0_11] : memref<2x4x256xf32, #tpu.memory_space<vmem>>, vector<2x4x256xf32>
    tpu.vector_store %arg2[%c0_9, %c0_10, %c0_11], %22 {strides = array<i32>} : memref<2x4x256xf32, #tpu.memory_space<vmem>>, vector<2x4x256xf32>,
    return
  }
  func.func @transform_0(%arg0: i32) -> (i32, i32, i32) {
    %c0_i32 = arith.constant 0 : i32
    %c0_i32_0 = arith.constant 0 : i32
    %c0_i32_1 = arith.constant 0 : i32
    return %c0_i32, %arg0, %c0_i32_0 : i32, i32, i32
  }
  func.func @transform_1(%arg0: i32) -> (i32, i32, i32) {
    %c0_i32 = arith.constant 0 : i32
    %c0_i32_0 = arith.constant 0 : i32
    %c0_i32_1 = arith.constant 0 : i32
    return %c0_i32, %arg0, %c0_i32_0 : i32, i32, i32
  }
}

</mosaic_0001>

<llo_original>
// kernel: tpu_custom_call.1
$region0: #{tpu_custom_call.1}
  #allocation0 [shape = 'u32[]', space=smem, size = 0x4, offset = 0x4, fixed_abs, tag = 'smem constant byte address 0x4 - core index']
  #allocation1 [shape = 'u32[144,128]{1,0:T(1,128)}', space=vmem, size = 0x12000, scoped, tag = 'internal scratch']
  %s0 = inlined_call_operand.hbm [shape: f32[2,4,256], index: 0, kind: input, shape index: {}]
  %s1 = inlined_call_operand.hbm [shape: f32[2,4,256], index: 1, kind: output, shape index: {}]
  %s2 = sld [smem:[#allocation0]]
  $region18: #{tpu_custom_call.1} parent=0
    _
  %s4 = ssub.s32 1, %s2
  %s5 = scalar_select 0, %s4, %s2
  $region1: #{tpu_custom_call.1} parent=0
    #allocation2 [shape = 'u8[8192]{0}', space=vmem, size = 0x2000, scoped, tag = 'input window, operand 0, single buffered']
    #allocation3 [shape = 's32[1]{0}', space=sflag, size = 0x4, scoped, tag = 'scoped memory for tpu_custom_call.1']
    #allocation4 [shape = 's32[1]{0}', space=sflag, size = 0x4, scoped, tag = 'scoped memory for tpu_custom_call.1']
    #allocation5 [shape = 'u8[8192]{0}', space=vmem, size = 0x2000, scoped, tag = 'output window, operand 0, single buffered']
    %6 = vsyncpa [#allocation3], 0
    %7 = vsyncpa [#allocation4], 0
    // Predicated region
    $region2: #{tpu_custom_call.1} parent=1 // pred_check
      _
    $region3: #{tpu_custom_call.1} parent=1 // pred_check_branch
      %9 = sbr.rel (0) target = $region5
    $region4: #{tpu_custom_call.1} parent=1 // pred_region
      %s11 = ssub.s32 256, 256
      %12 = vsyncadd [#allocation3], %s11
      %s13 = sshll.u32 [#allocation2], 4
      %s14 = int_to_ptr.vmem [resolvable:$true] %s13
      %19 = dma.hbm_to_vmem [thread:$0]  %s0, 256, %s14, [#allocation3], 128, 128, 8
    $region5: #{tpu_custom_call.1} parent=1 // pred_fallthru
      _
    // Predicated region
    $region6: #{tpu_custom_call.1} parent=1 // pred_check
      _
    $region7: #{tpu_custom_call.1} parent=1 // pred_check_branch
      %21 = sbr.rel (0) target = $region9
    $region8: #{tpu_custom_call.1} parent=1 // pred_region
      %22 = dma.done [#allocation3], 256
    $region9: #{tpu_custom_call.1} parent=1 // pred_fallthru
      _
    %v23 = vld [vmem:[#allocation2] sm:$0xff]
    %v24 = vld [vmem:[#allocation2 + $0x8] sm:$0xff]
    %v27 = vcombine.high %v23, %v23
    %v28 = vcombine.high %v24, %v24
    %vm31 = vcmask 1043456
    %v32 = vsel %vm31, %v23, 0.0
    %v33 = vsel %vm31, %v24, 0.0
    %v34 = vadd.f32 %v32, %v33
    %v35 = vsel %vm31, %v27, 0.0
    %v36 = vsel %vm31, %v28, 0.0
    %v37 = vadd.f32 %v35, %v36
    %v38 = vsel %vm31, %v34, 0.0
    %v39 = vsel %vm31, %v37, 0.0
    %v40 = vadd.f32 %v38, %v39
    %41 = vadd.xlane.f32.xlu0 %v40
    %v42 = vpop.xlane.xlu0 %41
    %v43 = vmul.f32 %v42, 0.001953125
    %v46 = vunpack.c.l.s4 839922192
    %v47 = vunpack.c.0.s8 %v46
    %v48 = vlaneseq
    %v49 = vshrl.u32 %v48, 7
    %v50 = vsub.s32 %v47, %v49
    %v51 = vrot.slane %v43, %v50
    %v53 = vsub.f32 %v23, %v51
    %v54 = vsub.f32 %v24, %v51
    %v55 = vmul.f32 %v53, %v53
    %v56 = vmul.f32 %v54, %v54
    %v59 = vcombine.high %v55, %v55
    %v60 = vcombine.high %v56, %v56
    %v63 = vsel %vm31, %v55, 0.0
    %v64 = vsel %vm31, %v56, 0.0
    %v65 = vadd.f32 %v63, %v64
    %v66 = vsel %vm31, %v59, 0.0
    %v67 = vsel %vm31, %v60, 0.0
    %v68 = vadd.f32 %v66, %v67
    %v69 = vsel %vm31, %v65, 0.0
    %v70 = vsel %vm31, %v68, 0.0
    %v71 = vadd.f32 %v69, %v70
    %72 = vadd.xlane.f32.xlu0 %v71
    %v73 = vpop.xlane.xlu0 %72
    %v74 = vmul.f32 %v73, 0.001953125
    %v75 = vmax.f32 %v74, 0.0
    %v76 = vadd.f32 %v75, 1e-05
    %v77 = vrsqrt.pop %v76
    %v80 = vunpack.c.l.s4 839922192
    %v81 = vunpack.c.0.s8 %v80
    %v82 = vlaneseq
    %v83 = vshrl.u32 %v82, 7
    %v84 = vsub.s32 %v81, %v83
    %v85 = vrot.slane %v77, %v84
    %v87 = vmul.f32 %v53, %v85
    %v88 = vmul.f32 %v54, %v85
    %89 = vst [vmem:[#allocation5] sm:$0xff] %v87
    %90 = vst [vmem:[#allocation5 + $0x8] sm:$0xff] %v88
    // Predicated region
    $region10: #{tpu_custom_call.1} parent=1 // pred_check
      _
    $region11: #{tpu_custom_call.1} parent=1 // pred_check_branch
      %92 = sbr.rel (0) target = $region13
    $region12: #{tpu_custom_call.1} parent=1 // pred_region
      %s94 = ssub.s32 256, 256
      %95 = vsyncadd [#allocation4], %s94
      %s96 = sshll.u32 [#allocation5], 4
      %s97 = int_to_ptr.vmem [resolvable:$true] %s96
      %102 = dma.vmem_to_hbm [thread:$0]  %s97, 256, %s1, [#allocation4], 128, 128, 8
    $region13: #{tpu_custom_call.1} parent=1 // pred_fallthru
      _
    // Predicated region
    $region14: #{tpu_custom_call.1} parent=1 // pred_check
      _
    $region15: #{tpu_custom_call.1} parent=1 // pred_check_branch
      %104 = sbr.rel (0) target = $region17
    $region16: #{tpu_custom_call.1} parent=1 // pred_region
      %105 = dma.done [#allocation4], 256
    $region17: #{tpu_custom_call.1} parent=1 // pred_fallthru
      _
    %106 = vsyncpa [#allocation3], 1
    %107 = vsyncpa [#allocation4], 1

</llo_original>
